<compile_context>
chip_gen: v5e
topology: v5e:2x2
jax: 0.10.0
libtpu: 0.0.40
codegen_flags: <defaults>
</compile_context>

<pallas_src>
import math
import functools

import jax
import jax.numpy as jnp
from jax.experimental import pallas as pl
from jax.experimental.pallas import tpu as pltpu


def _self_attention_kernel(*refs, has_mask, emit_att, compute_dtype, approx_recip):
    it = iter(refs)
    x_ref = next(it)                              # (Bb, S, E)  f32 (cast in-kernel)
    mask_ref = next(it) if has_mask else None     # (Bb, 1|S, S) int8
    wq_ref = next(it)                             # (E, E) compute_dtype, 1/sqrt(E) folded in
    wk_ref = next(it)
    wv_ref = next(it)
    wfc_ref = next(it)
    bfc_ref = next(it)                            # (1, E) f32
    out_ref = next(it)                            # (Bb, S, E)
    att_ref = next(it) if emit_att else None      # (Bb, S, S)

    Bb, S, E = x_ref.shape

    # Flatten rows (M = Bb*S) for dense MXU tiles; cast to the matmul dtype in-kernel.
    x2d = x_ref[...].reshape(Bb * S, E).astype(compute_dtype)

    # Q/K/V projections: f32 accumulation on the MXU, cast straight back to the
    # compute dtype (no f32 (Bb,S,E) copies kept live).
    q = jnp.dot(x2d, wq_ref[...], preferred_element_type=jnp.float32).astype(compute_dtype)
    k = jnp.dot(x2d, wk_ref[...], preferred_element_type=jnp.float32).astype(compute_dtype)
    v = jnp.dot(x2d, wv_ref[...], preferred_element_type=jnp.float32).astype(compute_dtype)
    qb = q.reshape(Bb, S, E)
    kb = k.reshape(Bb, S, E)
    vb = v.reshape(Bb, S, E)

    # Scores: contract the feature dim of both operands (no explicit K transpose).
    scores = jnp.einsum("bqe,bke->bqk", qb, kb,
                        preferred_element_type=jnp.float32)             # (Bb,S,S) f32

    if has_mask:
        mask = mask_ref[...]                      # (Bb, 1|S, S) int8; broadcasts over rows
        scores = jnp.where(mask != 0, jnp.float32(-1e9), scores)

    # Softmax in f32 (max-subtracted). Exact reciprocal when the weights are emitted
    # (rows must sum to 1 for downstream consumers); approx EUP reciprocal otherwise.
    m = jnp.max(scores, axis=-1, keepdims=True)
    p = jnp.exp(scores - m)
    denom = jnp.sum(p, axis=-1, keepdims=True)
    att = p * pl.reciprocal(denom, approx=approx_recip)                 # (Bb,S,S) f32

    if emit_att:
        att_ref[...] = att.astype(att_ref.dtype)

    # Attention-weighted values, then output fc (bias added in f32).
    ctx = jnp.einsum("bqk,bke->bqe", att.astype(compute_dtype), vb,
                     preferred_element_type=jnp.float32)                # (Bb,S,E) f32
    out = jnp.dot(ctx.reshape(Bb * S, E).astype(compute_dtype), wfc_ref[...],
                  preferred_element_type=jnp.float32) + bfc_ref[...]
    out_ref[...] = out.reshape(Bb, S, E).astype(out_ref.dtype)


def _vmem_capacity_bytes():
    """Physical VMEM per TensorCore; conservative 64 MiB (v7x-sized) fallback."""
    try:
        return int(pltpu.get_tpu_info().vmem_capacity_bytes)
    except Exception:
        return 64 * 1024 * 1024


def _per_step_vmem_bytes(Bb, S, E, mask_rows, emit_att, compute_dtype, att_dtype,
                         out_dtype):
    """Rough per-grid-step VMEM footprint (pipelined buffers + in-kernel temps)."""
    cw = jnp.dtype(compute_dtype).itemsize
    est = 2 * Bb * S * E * 4                                 # x f32 input (double-buffered)
    est += 2 * Bb * S * E * jnp.dtype(out_dtype).itemsize    # out (double-buffered)
    est += 4 * E * E * cw + E * 4                            # weights + bias (single-buffered)
    est += 3 * Bb * S * E * cw                               # q, k, v
    est += Bb * S * E * (4 + cw)                             # ctx f32 + compute-dtype copy
    est += 2 * Bb * S * S * 4                                # scores + p/att (f32)
    est += Bb * S * S * cw                                   # att cast for the ctx matmul
    if mask_rows:
        est += 2 * Bb * mask_rows * S                        # int8 mask (double-buffered)
    if emit_att:
        est += 2 * Bb * S * S * jnp.dtype(att_dtype).itemsize
    return est


def _pick_batch_block(B, S, E, mask_rows, emit_att, compute_dtype, att_dtype,
                      out_dtype):
    """Largest divisor of B that (a) keeps the grid length >= 2 when B >= 2 so the
    'parallel' axis can shard across TensorCores (v7x megacore), (b) targets
    ~1024 rows/step for MXU density / per-step overhead amortization and
    (c) keeps the per-step footprint under ~half of physical VMEM."""
    budget = _vmem_capacity_bytes() // 2
    row_target = 1024
    max_bb = 1 if B < 2 else max(1, B // 2)
    best = 1
    for d in range(1, max_bb + 1):
        if B % d != 0:
            continue
        if d > 1 and d * S > row_target:
            break
        if _per_step_vmem_bytes(d, S, E, mask_rows, emit_att, compute_dtype,
                                att_dtype, out_dtype) > budget:
            break
        best = d
    return best


def _const_in_spec(shape):
    """BlockSpec for a grid-invariant operand; single-buffered when supported."""
    index_map = lambda b: (0,) * len(shape)
    if hasattr(pl, "Buffered"):
        try:
            # Constant-index operands are fetched once; one buffer frees VMEM.
            return pl.BlockSpec(shape, index_map, pipeline_mode=pl.Buffered(1))
        except (TypeError, ValueError):
            pass
    return pl.BlockSpec(shape, index_map)


def self_attention(x, wq, wk, wv, wfc, bfc, pad_mask=None, *,
                   return_att_weights=True, compute_dtype=jnp.bfloat16,
                   att_dtype=jnp.float32, out_dtype=jnp.float32, block_b=None):
    """Pallas SelfAttention forward (matches the PyTorch module).

    x:        (B, S, E) float32
    wq/wk/wv: (E, E)    float32   (PyTorch nn.Linear layout: out x in, bias=False)
    wfc:      (E, E), bfc: (E,)
    pad_mask: optional bool/int mask broadcastable to (B, S, S); nonzero -> -1e9
              (matches torch masked_fill(pad_mask, -1e9)).
    Returns (output (B,S,E), att_weights (B,S,S)); att omitted if return_att_weights=False.
    """
    B, S, E = x.shape
    scale = 1.0 / math.sqrt(E)

    # Pre-transpose weights to (in, out) and fold the softmax scale into Wq (free).
    wq_t = (wq.T * scale).astype(compute_dtype)
    wk_t = wk.T.astype(compute_dtype)
    wv_t = wv.T.astype(compute_dtype)
    wfc_t = wfc.T.astype(compute_dtype)
    bfc2 = bfc.reshape(1, E).astype(jnp.float32)

    has_mask = pad_mask is not None
    mask = None
    mask_rows = 0
    if has_mask:
        m = jnp.asarray(pad_mask)
        if m.ndim == 3 and m.shape == (B, 1, S):
            mask = m.astype(jnp.int8)                     # small key-padding mask
        else:
            mask = jnp.broadcast_to(m, (B, S, S)).astype(jnp.int8)
        mask_rows = mask.shape[1]

    if block_b is None:
        Bb = _pick_batch_block(B, S, E, mask_rows, return_att_weights,
                               compute_dtype, att_dtype, out_dtype)
    else:
        Bb = block_b
    assert B % Bb == 0, "block_b must divide the batch size"
    grid = (B // Bb,)

    # Per-step footprint -> scoped VMEM limit, clamped to physical capacity.
    est = _per_step_vmem_bytes(Bb, S, E, mask_rows, return_att_weights,
                               compute_dtype, att_dtype, out_dtype)
    capacity = _vmem_capacity_bytes()
    vmem_limit = None
    if est > 12 * 1024 * 1024:
        vmem_limit = min(max(2 * est, 32 * 1024 * 1024),
                         capacity - 8 * 1024 * 1024)

    in_specs = [pl.BlockSpec((Bb, S, E), lambda b: (b, 0, 0))]          # x (f32; cast in-kernel)
    inputs = [x]
    if has_mask:
        in_specs.append(pl.BlockSpec((Bb, mask_rows, S), lambda b: (b, 0, 0)))
        inputs.append(mask)
    in_specs += [
        _const_in_spec((E, E)),                                         # Wq (scaled, T)
        _const_in_spec((E, E)),                                         # Wk (T)
        _const_in_spec((E, E)),                                         # Wv (T)
        _const_in_spec((E, E)),                                         # fc weight (T)
        _const_in_spec((1, E)),                                         # fc bias
    ]
    inputs += [wq_t, wk_t, wv_t, wfc_t, bfc2]

    out_shape = [jax.ShapeDtypeStruct((B, S, E), out_dtype)]
    out_specs = [pl.BlockSpec((Bb, S, E), lambda b: (b, 0, 0))]
    if return_att_weights:
        out_shape.append(jax.ShapeDtypeStruct((B, S, S), att_dtype))
        out_specs.append(pl.BlockSpec((Bb, S, S), lambda b: (b, 0, 0)))

    # Advisory cost estimate so XLA schedules/overlaps the custom call sensibly.
    cw = jnp.dtype(compute_dtype).itemsize
    flops = 8 * B * S * E * E + 4 * B * S * S * E + B * S * E
    bytes_accessed = (B * S * E * 4 + 4 * E * E * cw + E * 4
                      + B * S * E * jnp.dtype(out_dtype).itemsize)
    if has_mask:
        bytes_accessed += int(mask.size)
    if return_att_weights:
        bytes_accessed += B * S * S * jnp.dtype(att_dtype).itemsize
    cost = pl.CostEstimate(flops=flops, transcendentals=B * S * S,
                           bytes_accessed=bytes_accessed)

    kernel = functools.partial(_self_attention_kernel,
                               has_mask=has_mask,
                               emit_att=return_att_weights,
                               compute_dtype=compute_dtype,
                               approx_recip=not return_att_weights)

    results = pl.pallas_call(
        kernel,
        out_shape=tuple(out_shape),
        grid_spec=pltpu.PrefetchScalarGridSpec(
            num_scalar_prefetch=0,
            grid=grid,
            in_specs=in_specs,
            out_specs=out_specs,
        ),
        compiler_params=pltpu.CompilerParams(
            dimension_semantics=("parallel",),
            vmem_limit_bytes=vmem_limit),
        cost_estimate=cost,
    )(*inputs)

    if return_att_weights:
        out, att = results
        return out, att
    return results[0]


def _reference(x, wq, wk, wv, wfc, bfc, pad_mask=None):
    q = x @ wq.T
    k = x @ wk.T
    v = x @ wv.T
    s = jnp.einsum("bqe,bke->bqk", q, k) / math.sqrt(x.shape[-1])
    if pad_mask is not None:
        s = jnp.where(jnp.broadcast_to(pad_mask, s.shape), -1e9, s)
    att = jax.nn.softmax(s, axis=-1)
    out = jnp.einsum("bqk,bke->bqe", att, v) @ wfc.T + bfc
    return out, att


if __name__ == "__main__":
    B, S, E = 2, 8, 32
    key = jax.random.PRNGKey(0)
    kx, kq, kk, kv, kf, kb, km = jax.random.split(key, 7)

    x = jax.random.normal(kx, (B, S, E), dtype=jnp.float32)
    scale = 1.0 / math.sqrt(E)
    wq = jax.random.uniform(kq, (E, E), jnp.float32, -scale, scale)
    wk = jax.random.uniform(kk, (E, E), jnp.float32, -scale, scale)
    wv = jax.random.uniform(kv, (E, E), jnp.float32, -scale, scale)
    wfc = jax.random.uniform(kf, (E, E), jnp.float32, -scale, scale)
    bfc = jax.random.uniform(kb, (E,), jnp.float32, -scale, scale)

    atol = rtol = 5e-2   # bf16 matmul inputs, f32 accumulation

    # ---- no mask ----
    out, att = jax.jit(self_attention)(x, wq, wk, wv, wfc, bfc)
    jax.block_until_ready((out, att))
    ref_out, ref_att = _reference(x, wq, wk, wv, wfc, bfc)
    assert jnp.allclose(out, ref_out, atol=atol, rtol=rtol)
    assert jnp.allclose(att, ref_att, atol=atol, rtol=rtol)
    assert jnp.allclose(att.sum(-1), 1.0, atol=5e-3)

    # ---- (B, 1, S) key-padding mask (small int8 path, broadcast in kernel) ----
    pad = jax.random.uniform(km, (B, 1, S)) > 0.7
    out_m, att_m = jax.jit(self_attention)(x, wq, wk, wv, wfc, bfc, pad)
    jax.block_until_ready((out_m, att_m))
    ref_out_m, ref_att_m = _reference(x, wq, wk, wv, wfc, bfc, pad)
    assert jnp.allclose(out_m, ref_out_m, atol=atol, rtol=rtol)
    assert jnp.allclose(att_m, ref_att_m, atol=atol, rtol=rtol)
    assert jnp.allclose(att_m.sum(-1), 1.0, atol=5e-3)

    # ---- full (B, S, S) mask (general masked_fill path) ----
    pad_full = jnp.broadcast_to(pad, (B, S, S))
    out_f, att_f = jax.jit(self_attention)(x, wq, wk, wv, wfc, bfc, pad_full)
    jax.block_until_ready((out_f, att_f))
    ref_out_f, ref_att_f = _reference(x, wq, wk, wv, wfc, bfc, pad_full)
    assert jnp.allclose(out_f, ref_out_f, atol=atol, rtol=rtol)
    assert jnp.allclose(att_f, ref_att_f, atol=atol, rtol=rtol)

    print("KERNEL_OK")
</pallas_src>

<mosaic_0001>
module attributes {stable_mosaic.version = 11 : i64} {
  func.func @_self_attention_kernel(%arg0: i32, %arg1: memref<1x8x32xf32, #tpu.memory_space<vmem>>, %arg2: memref<32x32xbf16, #tpu.memory_space<vmem>>, %arg3: memref<32x32xbf16, #tpu.memory_space<vmem>>, %arg4: memref<32x32xbf16, #tpu.memory_space<vmem>>, %arg5: memref<32x32xbf16, #tpu.memory_space<vmem>>, %arg6: memref<1x32xf32, #tpu.memory_space<vmem>>, %arg7: memref<1x8x32xf32, #tpu.memory_space<vmem>>, %arg8: memref<1x8x8xf32, #tpu.memory_space<vmem>>) attributes {dimension_semantics = [#tpu.dimension_semantics<parallel>], iteration_bounds = array<i64: 2>, scalar_prefetch = 0 : i64, scratch_operands = 0 : i64, tpu.core_type = #tpu.core_type<tc>, window_params = [{transform_indices = @transform_0, window_bounds = array<i64: 1, 8, 32>}, {pipeline_mode = #tpu.pipeline_mode<synchronous>, transform_indices = @transform_1, window_bounds = array<i64: 32, 32>}, {pipeline_mode = #tpu.pipeline_mode<synchronous>, transform_indices = @transform_2, window_bounds = array<i64: 32, 32>}, {pipeline_mode = #tpu.pipeline_mode<synchronous>, transform_indices = @transform_3, window_bounds = array<i64: 32, 32>}, {pipeline_mode = #tpu.pipeline_mode<synchronous>, transform_indices = @transform_4, window_bounds = array<i64: 32, 32>}, {pipeline_mode = #tpu.pipeline_mode<synchronous>, transform_indices = @transform_5, window_bounds = array<i64: 1, 32>}, {transform_indices = @transform_6, window_bounds = array<i64: 1, 8, 32>}, {transform_indices = @transform_7, window_bounds = array<i64: 1, 8, 8>}]} {
    %c0 = arith.constant 0 : index
    %c0_0 = arith.constant 0 : index
    %c0_1 = arith.constant 0 : index
    %0 = vector.load %arg1[%c0, %c0_0, %c0_1] : memref<1x8x32xf32, #tpu.memory_space<vmem>>, vector<1x8x32xf32>
    %1 = vector.shape_cast %0 : vector<1x8x32xf32> to vector<8x32xf32>
    %2 = arith.truncf %1 : vector<8x32xf32> to vector<8x32xbf16>
    %c0_2 = arith.constant 0 : index
    %c0_3 = arith.constant 0 : index
    %3 = vector.load %arg2[%c0_2, %c0_3] : memref<32x32xbf16, #tpu.memory_space<vmem>>, vector<32x32xbf16>
    %cst = arith.constant dense<0.000000e+00> : vector<8x32xf32>
    %4 = tpu.matmul %2, %3, %cst {dimension_numbers = #tpu.dot_dimension_numbers<[1], [0], [0], [1], [0, 0, 1, 1], [], []>} : vector<8x32xbf16>, vector<32x32xbf16>, vector<8x32xf32> -> vector<8x32xf32>
    %5 = arith.truncf %4 : vector<8x32xf32> to vector<8x32xbf16>
    %c0_4 = arith.constant 0 : index
    %c0_5 = arith.constant 0 : index
    %6 = vector.load %arg3[%c0_4, %c0_5] : memref<32x32xbf16, #tpu.memory_space<vmem>>, vector<32x32xbf16>
    %cst_6 = arith.constant dense<0.000000e+00> : vector<8x32xf32>
    %7 = tpu.matmul %2, %6, %cst_6 {dimension_numbers = #tpu.dot_dimension_numbers<[1], [0], [0], [1], [0, 0, 1, 1], [], []>} : vector<8x32xbf16>, vector<32x32xbf16>, vector<8x32xf32> -> vector<8x32xf32>
    %8 = arith.truncf %7 : vector<8x32xf32> to vector<8x32xbf16>
    %c0_7 = arith.constant 0 : index
    %c0_8 = arith.constant 0 : index
    %9 = vector.load %arg4[%c0_7, %c0_8] : memref<32x32xbf16, #tpu.memory_space<vmem>>, vector<32x32xbf16>
    %cst_9 = arith.constant dense<0.000000e+00> : vector<8x32xf32>
    %10 = tpu.matmul %2, %9, %cst_9 {dimension_numbers = #tpu.dot_dimension_numbers<[1], [0], [0], [1], [0, 0, 1, 1], [], []>} : vector<8x32xbf16>, vector<32x32xbf16>, vector<8x32xf32> -> vector<8x32xf32>
    %11 = arith.truncf %10 : vector<8x32xf32> to vector<8x32xbf16>
    %12 = vector.shape_cast %5 : vector<8x32xbf16> to vector<1x8x32xbf16>
    %13 = vector.shape_cast %8 : vector<8x32xbf16> to vector<1x8x32xbf16>
    %14 = vector.shape_cast %11 : vector<8x32xbf16> to vector<1x8x32xbf16>
    "tpu.trace_start"() <{level = 10 : i32, message = "bqe,bke->bqk"}> : () -> ()
    %cst_10 = arith.constant dense<0.000000e+00> : vector<1x8x8xf32>
    %15 = tpu.matmul %12, %13, %cst_10 {dimension_numbers = #tpu.dot_dimension_numbers<[2], [2], [1], [1], [0, 0, 0, 1, 1, 1], [0], [0]>} : vector<1x8x32xbf16>, vector<1x8x32xbf16>, vector<1x8x8xf32> -> vector<1x8x8xf32>
    "tpu.trace_stop"() : () -> ()
    %cst_11 = arith.constant dense<0xFF800000> : vector<1x8xf32>
    %16 = vector.multi_reduction <maximumf>, %15, %cst_11 [2] : vector<1x8x8xf32> to vector<1x8xf32>
    %17 = vector.shape_cast %16 : vector<1x8xf32> to vector<1x8x1xf32>
    %18 = vector.broadcast %17 : vector<1x8x1xf32> to vector<1x8x8xf32>
    %19 = arith.subf %15, %18 : vector<1x8x8xf32>
    %20 = math.exp %19 : vector<1x8x8xf32>
    %cst_12 = arith.constant dense<0.000000e+00> : vector<1x8xf32>
    %21 = vector.multi_reduction <add>, %20, %cst_12 [2] : vector<1x8x8xf32> to vector<1x8xf32>
    %22 = vector.shape_cast %21 : vector<1x8xf32> to vector<1x8x1xf32>
    %23 = tpu.reciprocal %22 : vector<1x8x1xf32> -> vector<1x8x1xf32>
    %24 = vector.broadcast %23 : vector<1x8x1xf32> to vector<1x8x8xf32>
    %25 = arith.mulf %20, %24 : vector<1x8x8xf32>
    %c0_13 = arith.constant 0 : index
    %c0_14 = arith.constant 0 : index
    %c0_15 = arith.constant 0 : index
    %26 = vector.load %arg8[%c0_13, %c0_14, %c0_15] : memref<1x8x8xf32, #tpu.memory_space<vmem>>, vector<1x8x8xf32>
    tpu.vector_store %arg8[%c0_13, %c0_14, %c0_15], %25 {strides = array<i32>} : memref<1x8x8xf32, #tpu.memory_space<vmem>>, vector<1x8x8xf32>,
    %27 = arith.truncf %25 : vector<1x8x8xf32> to vector<1x8x8xbf16>
    "tpu.trace_start"() <{level = 10 : i32, message = "bqk,bke->bqe"}> : () -> ()
    %cst_16 = arith.constant dense<0.000000e+00> : vector<1x8x32xf32>
    %28 = tpu.matmul %27, %14, %cst_16 {dimension_numbers = #tpu.dot_dimension_numbers<[2], [1], [1], [2], [0, 0, 0, 1, 1, 2], [0], [0]>} : vector<1x8x8xbf16>, vector<1x8x32xbf16>, vector<1x8x32xf32> -> vector<1x8x32xf32>
    "tpu.trace_stop"() : () -> ()
    %29 = vector.shape_cast %28 : vector<1x8x32xf32> to vector<8x32xf32>
    %30 = arith.truncf %29 : vector<8x32xf32> to vector<8x32xbf16>
    %c0_17 = arith.constant 0 : index
    %c0_18 = arith.constant 0 : index
    %31 = vector.load %arg5[%c0_17, %c0_18] : memref<32x32xbf16, #tpu.memory_space<vmem>>, vector<32x32xbf16>
    %cst_19 = arith.constant dense<0.000000e+00> : vector<8x32xf32>
    %32 = tpu.matmul %30, %31, %cst_19 {dimension_numbers = #tpu.dot_dimension_numbers<[1], [0], [0], [1], [0, 0, 1, 1], [], []>} : vector<8x32xbf16>, vector<32x32xbf16>, vector<8x32xf32> -> vector<8x32xf32>
    %c0_20 = arith.constant 0 : index
    %c0_21 = arith.constant 0 : index
    %33 = vector.load %arg6[%c0_20, %c0_21] : memref<1x32xf32, #tpu.memory_space<vmem>>, vector<1x32xf32>
    %34 = vector.broadcast %33 : vector<1x32xf32> to vector<8x32xf32>
    %35 = arith.addf %32, %34 : vector<8x32xf32>
    %36 = vector.shape_cast %35 : vector<8x32xf32> to vector<1x8x32xf32>
    %c0_22 = arith.constant 0 : index
    %c0_23 = arith.constant 0 : index
    %c0_24 = arith.constant 0 : index
    %37 = vector.load %arg7[%c0_22, %c0_23, %c0_24] : memref<1x8x32xf32, #tpu.memory_space<vmem>>, vector<1x8x32xf32>
    tpu.vector_store %arg7[%c0_22, %c0_23, %c0_24], %36 {strides = array<i32>} : memref<1x8x32xf32, #tpu.memory_space<vmem>>, vector<1x8x32xf32>,
    return
  }
  func.func @transform_0(%arg0: i32) -> (i32, i32, i32) {
    %c0_i32 = arith.constant 0 : i32
    %c0_i32_0 = arith.constant 0 : i32
    %c0_i32_1 = arith.constant 0 : i32
    return %arg0, %c0_i32, %c0_i32_0 : i32, i32, i32
  }
  func.func @transform_1(%arg0: i32) -> (i32, i32) {
    %c0_i32 = arith.constant 0 : i32
    %c0_i32_0 = arith.constant 0 : i32
    %c0_i32_1 = arith.constant 0 : i32
    return %c0_i32, %c0_i32_0 : i32, i32
  }
  func.func @transform_2(%arg0: i32) -> (i32, i32) {
    %c0_i32 = arith.constant 0 : i32
    %c0_i32_0 = arith.constant 0 : i32
    %c0_i32_1 = arith.constant 0 : i32
    return %c0_i32, %c0_i32_0 : i32, i32
  }
  func.func @transform_3(%arg0: i32) -> (i32, i32) {
    %c0_i32 = arith.constant 0 : i32
    %c0_i32_0 = arith.constant 0 : i32
    %c0_i32_1 = arith.constant 0 : i32
    return %c0_i32, %c0_i32_0 : i32, i32
  }
  func.func @transform_4(%arg0: i32) -> (i32, i32) {
    %c0_i32 = arith.constant 0 : i32
    %c0_i32_0 = arith.constant 0 : i32
    %c0_i32_1 = arith.constant 0 : i32
    return %c0_i32, %c0_i32_0 : i32, i32
  }
  func.func @transform_5(%arg0: i32) -> (i32, i32) {
    %c0_i32 = arith.constant 0 : i32
    %c0_i32_0 = arith.constant 0 : i32
    %c0_i32_1 = arith.constant 0 : i32
    return %c0_i32, %c0_i32_0 : i32, i32
  }
  func.func @transform_6(%arg0: i32) -> (i32, i32, i32) {
    %c0_i32 = arith.constant 0 : i32
    %c0_i32_0 = arith.constant 0 : i32
    %c0_i32_1 = arith.constant 0 : i32
    return %arg0, %c0_i32, %c0_i32_0 : i32, i32, i32
  }
  func.func @transform_7(%arg0: i32) -> (i32, i32, i32) {
    %c0_i32 = arith.constant 0 : i32
    %c0_i32_0 = arith.constant 0 : i32
    %c0_i32_1 = arith.constant 0 : i32
    return %arg0, %c0_i32, %c0_i32_0 : i32, i32, i32
  }
}

</mosaic_0001>

<llo_original>
// kernel: self_attention.1
$region0: #{self_attention.1}
  #allocation0 [shape = 'u32[]', space=smem, size = 0x4, offset = 0x4, fixed_abs, tag = 'smem constant byte address 0x4 - core index']
  #allocation1 [shape = 'u32[72,128]{1,0:T(1,128)}', space=vmem, size = 0x9000, scoped, tag = 'internal scratch']
  %s0 = inlined_call_operand.vmem [shape: f32[2,8,32], index: 0, kind: input, shape index: {}]
  %s1 = inlined_call_operand.vmem [shape: bf16[32,32], index: 1, kind: input, shape index: {}]
  %s2 = inlined_call_operand.vmem [shape: bf16[32,32], index: 2, kind: input, shape index: {}]
  %s3 = inlined_call_operand.vmem [shape: bf16[32,32], index: 3, kind: input, shape index: {}]
  %s4 = inlined_call_operand.vmem [shape: bf16[32,32], index: 4, kind: input, shape index: {}]
  %s5 = inlined_call_operand.vmem [shape: f32[1,32], index: 5, kind: input, shape index: {}]
  %s6 = inlined_call_operand.hbm [shape: f32[2,8,32], index: 6, kind: output, shape index: {0}]
  %s7 = inlined_call_operand.hbm [shape: f32[2,8,8], index: 7, kind: output, shape index: {1}]
  %8 = xla_tuple %s6, %s7
  %s9 = sld [smem:[#allocation0]]
  $region65: #{self_attention.1} parent=0
    _
  %s11 = ssub.s32 1, %s9
  %s12 = scalar_select 0, %s11, %s9
  $region1: #{self_attention.1} parent=0
    #allocation2 [shape = 'u8[8192]{0}', space=vmem, size = 0x2000, scoped, tag = 'output window, operand 0']
    #allocation3 [shape = 's32[2]{0}', space=sflag, size = 0x8, scoped, tag = 'scoped memory for self_attention.1']
    #allocation4 [shape = 'u8[8192]{0}', space=vmem, size = 0x2000, scoped, tag = 'output window, operand 1']
    #allocation5 [shape = 's32[2]{0}', space=sflag, size = 0x8, scoped, tag = 'scoped memory for self_attention.1']
    %13 = vsyncpa [#allocation3], 0
    %s14 = scalar_lea.sflag [#allocation3], 1
    %15 = vsyncpa %s14, 0
    %16 = vsyncpa [#allocation5], 0
    %s17 = scalar_lea.sflag [#allocation5], 1
    %18 = vsyncpa %s17, 0
    loop: start=0, step=1, limit=4
    $region2: #{self_attention.1} parent=1 // loop_pre_header
      _
    $region3: #{self_attention.1} parent=1 // loop_header
      %s20 = sphi 0, %s24
      %p21 = scmp.ge.s32.totalorder %s20, 4
      %s30 = sphi 0, %s32
      %s33 = sphi 0, %s30
      %s34 = sphi 0, %s33
      %s50 = sphi 0, %s34
      %s54 = sphi 0, %s54
      %s56 = sphi 0, %s54
      %s57 = sphi 0, %s56
      %s71 = sphi 0, %s57
      %s75 = sphi 0, %s75
      %s77 = sphi 0, %s75
      %s78 = sphi 0, %s77
      %s92 = sphi 0, %s78
      %s96 = sphi 0, %s96
      %s98 = sphi 0, %s96
      %s99 = sphi 0, %s98
      %s113 = sphi 0, %s99
      %s117 = sphi 0, %s117
      %s119 = sphi 0, %s117
      %s120 = sphi 0, %s119
      %s134 = sphi 0, %s120
      %s138 = sphi 0, %s138
      %s140 = sphi 0, %s138
      %s141 = sphi 0, %s140
      %s155 = sphi 0, %s141
      %s161 = sphi 0, %s163
      %s164 = sphi 0, %s161
      %s165 = sphi 0, %s164
      %s181 = sphi 0, %s165
      %s187 = sphi 0, %s189
      %s190 = sphi 0, %s187
      %s191 = sphi 0, %s190
      %s207 = sphi 0, %s191
    $region4: #{self_attention.1} parent=1 // loop_header_branch
      %23 = sbr.rel (%p21) target = $region8
    $region5: #{self_attention.1} parent=1 // loop_body
      %s25 = ssub.s32 %s20, 1
      %s26 = ssub.s32 %s20, 2
      %s27 = sadd.s32 %s20, 1
      %s28 = ssub.s32 %s20, %s27
      %p29 = scmp.eq.s32.totalorder %s28, 0
      %s31 = sadd.s32 %s30, 1
      %s32 = scalar_select %p29, %s30, %s31
      %p35 = pneg %p29
      %p36 = scmp.eq.s32.totalorder %s20, 1
      %p37 = por %p35, %p36
      %p38 = scmp.ne.s32.totalorder %s30, %s33
      %p39 = scmp.eq.s32.totalorder %s20, 0
      %p40 = por %p38, %p39
      %p41 = scmp.ne.s32.totalorder %s30, %s33
      %p42 = scmp.eq.s32.totalorder %s25, 1
      %p43 = por %p41, %p42
      %p44 = scmp.ne.s32.totalorder %s33, %s34
      %p45 = scmp.eq.s32.totalorder %s25, 0
      %p46 = por %p44, %p45
      %p47 = scmp.ne.s32.totalorder %s33, %s34
      %p48 = scmp.eq.s32.totalorder %s26, 1
      %p49 = por %p47, %p48
      %p51 = scmp.ne.s32.totalorder %s34, %s50
      %p52 = scmp.eq.s32.totalorder %s26, 0
      %p53 = por %p51, %p52
      %s55 = sadd.s32 %s54, 1
      %p58 = scmp.eq.s32.totalorder %s20, 1
      %p59 = scmp.ne.s32.totalorder %s54, %s56
      %p60 = scmp.eq.s32.totalorder %s20, 0
      %p61 = por %p59, %p60
      %p62 = scmp.ne.s32.totalorder %s54, %s56
      %p63 = scmp.eq.s32.totalorder %s25, 1
      %p64 = por %p62, %p63
      %p65 = scmp.ne.s32.totalorder %s56, %s57
      %p66 = scmp.eq.s32.totalorder %s25, 0
      %p67 = por %p65, %p66
      %p68 = scmp.ne.s32.totalorder %s56, %s57
      %p69 = scmp.eq.s32.totalorder %s26, 1
      %p70 = por %p68, %p69
      %p72 = scmp.ne.s32.totalorder %s57, %s71
      %p73 = scmp.eq.s32.totalorder %s26, 0
      %p74 = por %p72, %p73
      %s76 = sadd.s32 %s75, 1
      %p79 = scmp.eq.s32.totalorder %s20, 1
      %p80 = scmp.ne.s32.totalorder %s75, %s77
      %p81 = scmp.eq.s32.totalorder %s20, 0
      %p82 = por %p80, %p81
      %p83 = scmp.ne.s32.totalorder %s75, %s77
      %p84 = scmp.eq.s32.totalorder %s25, 1
      %p85 = por %p83, %p84
      %p86 = scmp.ne.s32.totalorder %s77, %s78
      %p87 = scmp.eq.s32.totalorder %s25, 0
      %p88 = por %p86, %p87
      %p89 = scmp.ne.s32.totalorder %s77, %s78
      %p90 = scmp.eq.s32.totalorder %s26, 1
      %p91 = por %p89, %p90
      %p93 = scmp.ne.s32.totalorder %s78, %s92
      %p94 = scmp.eq.s32.totalorder %s26, 0
      %p95 = por %p93, %p94
      %s97 = sadd.s32 %s96, 1
      %p100 = scmp.eq.s32.totalorder %s20, 1
      %p101 = scmp.ne.s32.totalorder %s96, %s98
      %p102 = scmp.eq.s32.totalorder %s20, 0
      %p103 = por %p101, %p102
      %p104 = scmp.ne.s32.totalorder %s96, %s98
      %p105 = scmp.eq.s32.totalorder %s25, 1
      %p106 = por %p104, %p105
      %p107 = scmp.ne.s32.totalorder %s98, %s99
      %p108 = scmp.eq.s32.totalorder %s25, 0
      %p109 = por %p107, %p108
      %p110 = scmp.ne.s32.totalorder %s98, %s99
      %p111 = scmp.eq.s32.totalorder %s26, 1
      %p112 = por %p110, %p111
      %p114 = scmp.ne.s32.totalorder %s99, %s113
      %p115 = scmp.eq.s32.totalorder %s26, 0
      %p116 = por %p114, %p115
      %s118 = sadd.s32 %s117, 1
      %p121 = scmp.eq.s32.totalorder %s20, 1
      %p122 = scmp.ne.s32.totalorder %s117, %s119
      %p123 = scmp.eq.s32.totalorder %s20, 0
      %p124 = por %p122, %p123
      %p125 = scmp.ne.s32.totalorder %s117, %s119
      %p126 = scmp.eq.s32.totalorder %s25, 1
      %p127 = por %p125, %p126
      %p128 = scmp.ne.s32.totalorder %s119, %s120
      %p129 = scmp.eq.s32.totalorder %s25, 0
      %p130 = por %p128, %p129
      %p131 = scmp.ne.s32.totalorder %s119, %s120
      %p132 = scmp.eq.s32.totalorder %s26, 1
      %p133 = por %p131, %p132
      %p135 = scmp.ne.s32.totalorder %s120, %s134
      %p136 = scmp.eq.s32.totalorder %s26, 0
      %p137 = por %p135, %p136
      %s139 = sadd.s32 %s138, 1
      %p142 = scmp.eq.s32.totalorder %s20, 1
      %p143 = scmp.ne.s32.totalorder %s138, %s140
      %p144 = scmp.eq.s32.totalorder %s20, 0
      %p145 = por %p143, %p144
      %p146 = scmp.ne.s32.totalorder %s138, %s140
      %p147 = scmp.eq.s32.totalorder %s25, 1
      %p148 = por %p146, %p147
      %p149 = scmp.ne.s32.totalorder %s140, %s141
      %p150 = scmp.eq.s32.totalorder %s25, 0
      %p151 = por %p149, %p150
      %p152 = scmp.ne.s32.totalorder %s140, %s141
      %p153 = scmp.eq.s32.totalorder %s26, 1
      %p154 = por %p152, %p153
      %p156 = scmp.ne.s32.totalorder %s141, %s155
      %p157 = scmp.eq.s32.totalorder %s26, 0
      %p158 = por %p156, %p157
      %s159 = ssub.s32 %s20, %s27
      %p160 = scmp.eq.s32.totalorder %s159, 0
      %s162 = sadd.s32 %s161, 1
      %s163 = scalar_select %p160, %s161, %s162
      %p166 = pneg %p160
      %p167 = scmp.eq.s32.totalorder %s20, 1
      %p168 = por %p166, %p167
      %p169 = scmp.ne.s32.totalorder %s161, %s164
      %p170 = scmp.eq.s32.totalorder %s20, 0
      %p171 = por %p169, %p170
      %p172 = scmp.ne.s32.totalorder %s161, %s164
      %p173 = scmp.eq.s32.totalorder %s25, 1
      %p174 = por %p172, %p173
      %p175 = scmp.ne.s32.totalorder %s164, %s165
      %p176 = scmp.eq.s32.totalorder %s25, 0
      %p177 = por %p175, %p176
      %p178 = scmp.ne.s32.totalorder %s164, %s165
      %p179 = scmp.eq.s32.totalorder %s26, 1
      %p180 = por %p178, %p179
      %p182 = scmp.ne.s32.totalorder %s165, %s181
      %p183 = scmp.eq.s32.totalorder %s26, 0
      %p184 = por %p182, %p183
      %s185 = ssub.s32 %s20, %s27
      %p186 = scmp.eq.s32.totalorder %s185, 0
      %s188 = sadd.s32 %s187, 1
      %s189 = scalar_select %p186, %s187, %s188
      %p192 = pneg %p186
      %p193 = scmp.eq.s32.totalorder %s20, 1
      %p194 = por %p192, %p193
      %p195 = scmp.ne.s32.totalorder %s187, %s190
      %p196 = scmp.eq.s32.totalorder %s20, 0
      %p197 = por %p195, %p196
      %p198 = scmp.ne.s32.totalorder %s187, %s190
      %p199 = scmp.eq.s32.totalorder %s25, 1
      %p200 = por %p198, %p199
      %p201 = scmp.ne.s32.totalorder %s190, %s191
      %p202 = scmp.eq.s32.totalorder %s25, 0
      %p203 = por %p201, %p202
      %p204 = scmp.ne.s32.totalorder %s190, %s191
      %p205 = scmp.eq.s32.totalorder %s26, 1
      %p206 = por %p204, %p205
      %p208 = scmp.ne.s32.totalorder %s191, %s207
      %p209 = scmp.eq.s32.totalorder %s26, 0
      %p210 = por %p208, %p209
      %p211 = scmp.le.s32.totalorder 1, %s20
      %p212 = scmp.lt.s32.totalorder %s20, 3
      %p213 = pnand %p211, %p212
      %p214 = pneg %p213
      // Predicated region
      $region9: #{self_attention.1} parent=5 // pred_check
        _
      $region10: #{self_attention.1} parent=5 // pred_check_branch
        %216 = sbr.rel (%p213) target = $region12
      $region11: #{self_attention.1} parent=5 // pred_region
        %s217 = ssub.s32 %s20, 1
        // Predicated region
        $region13: #{self_attention.1} parent=11 // pred_check
          %p218 = pneg %p67
        $region14: #{self_attention.1} parent=11 // pred_check_branch
          %220 = sbr.rel (%p218) target = $region16
        $region15: #{self_attention.1} parent=11 // pred_region
          _
        $region16: #{self_attention.1} parent=11 // pred_fallthru
          _
        // Predicated region
        $region17: #{self_attention.1} parent=11 // pred_check
          %p221 = pneg %p88
        $region18: #{self_attention.1} parent=11 // pred_check_branch
          %223 = sbr.rel (%p221) target = $region20
        $region19: #{self_attention.1} parent=11 // pred_region
          _
        $region20: #{self_attention.1} parent=11 // pred_fallthru
          _
        // Predicated region
        $region21: #{self_attention.1} parent=11 // pred_check
          %p224 = pneg %p109
        $region22: #{self_attention.1} parent=11 // pred_check_branch
          %226 = sbr.rel (%p224) target = $region24
        $region23: #{self_attention.1} parent=11 // pred_region
          _
        $region24: #{self_attention.1} parent=11 // pred_fallthru
          _
        // Predicated region
        $region25: #{self_attention.1} parent=11 // pred_check
          %p227 = pneg %p130
        $region26: #{self_attention.1} parent=11 // pred_check_branch
          %229 = sbr.rel (%p227) target = $region28
        $region27: #{self_attention.1} parent=11 // pred_region
          _
        $region28: #{self_attention.1} parent=11 // pred_fallthru
          _
        // Predicated region
        $region29: #{self_attention.1} parent=11 // pred_check
          %p230 = pneg %p151
        $region30: #{self_attention.1} parent=11 // pred_check_branch
          %232 = sbr.rel (%p230) target = $region32
        $region31: #{self_attention.1} parent=11 // pred_region
          _
        $region32: #{self_attention.1} parent=11 // pred_fallthru
          _
      $region12: #{self_attention.1} parent=5 // pred_fallthru
        _
      %p233 = scmp.lt.s32.totalorder %s20, 2
      // Predicated region
      $region33: #{self_attention.1} parent=5 // pred_check
        %p234 = pneg %p233
      $region34: #{self_attention.1} parent=5 // pred_check_branch
        %236 = sbr.rel (%p234) target = $region36
      $region35: #{self_attention.1} parent=5 // pred_region
        // Predicated region
        $region37: #{self_attention.1} parent=35 // pred_check
          %p237 = pneg %p40
        $region38: #{self_attention.1} parent=35 // pred_check_branch
          %239 = sbr.rel (%p237) target = $region40
        $region39: #{self_attention.1} parent=35 // pred_region
          %p240 = scmp.lt.s32.totalorder %s20, 1
          %s241 = scalar_select %p240, %s20, 1
          %s242 = smul.addr %s241, 8
          %s243 = scalar_lea.vmem %s0, %s242
        $region40: #{self_attention.1} parent=35 // pred_fallthru
          _
      $region36: #{self_attention.1} parent=5 // pred_fallthru
        _
      %p244 = scmp.le.s32.totalorder 1, %s20
      %p245 = scmp.lt.s32.totalorder %s20, 3
      %p246 = pnand %p244, %p245
      %p247 = pneg %p246
      // Predicated region
      $region41: #{self_attention.1} parent=5 // pred_check
        _
      $region42: #{self_attention.1} parent=5 // pred_check_branch
        %249 = sbr.rel (%p246) target = $region44
      $region43: #{self_attention.1} parent=5 // pred_region
        %s250 = ssub.s32 %s20, 1
        %p251 = scmp.lt.s32.totalorder %s25, 1
        %s252 = scalar_select %p251, %s25, 1
        %s253 = smul.addr %s252, 8
        %s254 = scalar_lea.vmem %s0, %s253
        %p255 = pneg %p46
        %p256 = pneg %p43
        %p257 = pneg %p67
        %p258 = pneg %p64
        %p259 = pneg %p88
        %p260 = pneg %p85
        %p261 = pneg %p109
        %p262 = pneg %p106
        %p263 = pneg %p130
        %p264 = pneg %p127
        %p265 = pneg %p151
        %p266 = pneg %p148
        %p267 = pneg %p177
        %p268 = pneg %p174
        %s269 = sand.u32 %s164, 1
        %s270 = scalar_lea.sflag [#allocation3], %s269
        %s271 = sand.u32 %s164, 1
        %s272 = smul.addr %s271, 8
        %s273 = scalar_lea.vmem [#allocation2], %s272
        %p274 = pneg %p203
        %p275 = pneg %p200
        %s276 = sand.u32 %s190, 1
        %s277 = scalar_lea.sflag [#allocation5], %s276
        %s278 = sand.u32 %s190, 1
        %s279 = smul.addr %s278, 8
        %s280 = scalar_lea.vmem [#allocation4], %s279
        %p281 = scmp.lt.s32.totalorder %s25, 1
        %s282 = scalar_select %p281, %s25, 1
        %s283 = smul.addr %s282, 8
        %s284 = scalar_lea.vmem %s0, %s283
        %v286 = vld [vmem:[%s284] sm:$0xff]
        %v287 = vpack.c.bf16 %v286, %v286
        %v288 = vld [vmem:[%s1] sm:$0xf]
        %v289 = vld [vmem:[%s1 + $0x4] sm:$0xf]
        %v290 = vld [vmem:[%s1 + $0x8] sm:$0xf]
        %v291 = vld [vmem:[%s1 + $0xc] sm:$0xf]
        %v296 = vunpack.c.l.b16 %v288
        %v297 = vunpack.c.l.b16 %v289
        %v298 = vunpack.c.l.b16 %v290
        %v299 = vunpack.c.l.b16 %v291
        %v300 = vpack.c.b16 %v297, %v296
        %v301 = vpack.c.b16 %v299, %v298
        %vm304 = vcmask 261120
        %v306 = vsel %vm304, %v287, 0
        %308 = vmatpush.bf16.msra.mxu0 0
        %309 = vmatpush.bf16.msra.mxu0 0
        %310 = vmatpush.bf16.msra.mxu0 0
        %311 = vmatpush.bf16.msra.mxu0 0
        %312 = vmatpush.bf16.msra.mxu0 0
        %313 = vmatpush.bf16.msra.mxu0 0
        %314 = vmatpush.bf16.msra.mxu0 %v301
        %315 = vmatpush.bf16.msra.mxu0 %v300
        %316 = vmatmul.bf16.gmra.mxu0 %v306
        %v317 = vpop.f32.mrf.mxu0
        %v318 = vadd.f32 0.0, %v317
        %v319 = vpop.f32.mrf.mxu0
        %320 = vdwg.mxu0
        %v321 = vpack.c.bf16 %v318, %v318
        %v322 = vld [vmem:[%s2] sm:$0xf]
        %v323 = vld [vmem:[%s2 + $0x4] sm:$0xf]
        %v324 = vld [vmem:[%s2 + $0x8] sm:$0xf]
        %v325 = vld [vmem:[%s2 + $0xc] sm:$0xf]
        %v330 = vunpack.c.l.b16 %v322
        %v331 = vunpack.c.l.b16 %v323
        %v332 = vunpack.c.l.b16 %v324
        %v333 = vunpack.c.l.b16 %v325
        %v334 = vpack.c.b16 %v331, %v330
        %v335 = vpack.c.b16 %v333, %v332
        %338 = vmatpush.bf16.msra.mxu0 0
        %339 = vmatpush.bf16.msra.mxu0 0
        %340 = vmatpush.bf16.msra.mxu0 0
        %341 = vmatpush.bf16.msra.mxu0 0
        %342 = vmatpush.bf16.msra.mxu0 0
        %343 = vmatpush.bf16.msra.mxu0 0
        %344 = vmatpush.bf16.msra.mxu0 %v335
        %345 = vmatpush.bf16.msra.mxu0 %v334
        %346 = vmatmul.bf16.gmra.mxu0 %v306
        %v347 = vpop.f32.mrf.mxu0
        %v348 = vadd.f32 0.0, %v347
        %v349 = vpop.f32.mrf.mxu0
        %350 = vdwg.mxu0
        %v351 = vpack.c.bf16 %v348, %v348
        %v352 = vld [vmem:[%s3] sm:$0xf]
        %v353 = vld [vmem:[%s3 + $0x4] sm:$0xf]
        %v354 = vld [vmem:[%s3 + $0x8] sm:$0xf]
        %v355 = vld [vmem:[%s3 + $0xc] sm:$0xf]
        %v360 = vunpack.c.l.b16 %v352
        %v361 = vunpack.c.l.b16 %v353
        %v362 = vunpack.c.l.b16 %v354
        %v363 = vunpack.c.l.b16 %v355
        %v364 = vpack.c.b16 %v361, %v360
        %v365 = vpack.c.b16 %v363, %v362
        %368 = vmatpush.bf16.msra.mxu0 0
        %369 = vmatpush.bf16.msra.mxu0 0
        %370 = vmatpush.bf16.msra.mxu0 0
        %371 = vmatpush.bf16.msra.mxu0 0
        %372 = vmatpush.bf16.msra.mxu0 0
        %373 = vmatpush.bf16.msra.mxu0 0
        %374 = vmatpush.bf16.msra.mxu0 %v365
        %375 = vmatpush.bf16.msra.mxu0 %v364
        %376 = vmatmul.bf16.gmra.mxu0 %v306
        %v377 = vpop.f32.mrf.mxu0
        %v378 = vadd.f32 0.0, %v377
        %v379 = vpop.f32.mrf.mxu0
        %380 = vdwg.mxu0
        %v381 = vpack.c.bf16 %v378, %v378
        %v383 = vsel %vm304, %v321, 0
        %v386 = vsel %vm304, %v351, 0
        %388 = vmatpush.bf16.xpose.msra.mxu0 0
        %389 = vmatpush.bf16.xpose.msra.mxu0 0
        %390 = vmatpush.bf16.xpose.msra.mxu0 0
        %391 = vmatpush.bf16.xpose.msra.mxu0 0
        %392 = vmatpush.bf16.xpose.msra.mxu0 0
        %393 = vmatpush.bf16.xpose.msra.mxu0 0
        %394 = vmatpush.bf16.xpose.msra.mxu0 0
        %395 = vmatpush.bf16.xpose.msra.mxu0 %v386
        %396 = vmatmul.bf16.gmra.mxu0 %v383
        %v397 = vpop.f32.mrf.mxu0
        %v398 = vadd.f32 0.0, %v397
        %v399 = vpop.f32.mrf.mxu0
        %400 = vdwg.mxu0
        %vm401 = vcmask 64512
        %v402 = vsel %vm401, %v398, -inf
        %403 = vmax.xlane.f32.xlu0 %v402
        %v404 = vpop.xlane.xlu0 %403
        %v405 = vsub.f32 %v398, %v404
        %v406 = vmul.f32 %v405, 1.442695
        %v407 = vpow.pop %v406
        %v408 = vsel %vm401, %v407, 0.0
        %409 = vadd.xlane.f32.xlu0 %v408
        %v410 = vpop.xlane.xlu0 %409
        %v411 = vrcp.pop %v410
        %v412 = vmul.f32 %v410, %v411
        %v413 = vsub.f32 1.0, %v412
        %v414 = vmul.f32 %v411, %v413
        %v415 = vadd.f32 %v411, %v414
        %vm416 = vweird.f32 %v410
        %vm417 = vweird.f32 %v411
        %vm418 = vmor %vm416, %vm417
        %v419 = vsel %vm418, %v411, %v415
        %v420 = vand.u32 2147483647, %v410
        %vm421 = vcmp.eq.f32.partialorder %v420, 8.507059e+37
        %v422 = vand.u32 %v410, 2147483648
        %v423 = vor.u32 1.1754944e-38, %v422
        %v424 = vsel %vm421, %v423, %v419
        %v425 = vmul.f32 %v407, %v424
        %426 = vst.msk [vmem:[%s280] sm:$0xff] %vm401, %v425
        %v427 = vpack.c.bf16 %v425, %v425
        %v429 = vsel %vm401, %v427, 0
        %vm431 = vcmask 1043456
        %v433 = vsel %vm431, %v381, 0
        %435 = vmatpush.bf16.msra.mxu0 0
        %436 = vmatpush.bf16.msra.mxu0 0
        %437 = vmatpush.bf16.msra.mxu0 0
        %438 = vmatpush.bf16.msra.mxu0 0
        %439 = vmatpush.bf16.msra.mxu0 0
        %440 = vmatpush.bf16.msra.mxu0 0
        %441 = vmatpush.bf16.msra.mxu0 0
        %442 = vmatpush.bf16.msra.mxu0 %v433
        %443 = vmatmul.bf16.gmra.mxu0 %v429
        %v444 = vpop.f32.mrf.mxu0
        %v445 = vadd.f32 0.0, %v444
        %v446 = vpop.f32.mrf.mxu0
        %447 = vdwg.mxu0
        %v448 = vpack.c.bf16 %v445, %v445
        %v449 = vld [vmem:[%s4] sm:$0xf]
        %v450 = vld [vmem:[%s4 + $0x4] sm:$0xf]
        %v451 = vld [vmem:[%s4 + $0x8] sm:$0xf]
        %v452 = vld [vmem:[%s4 + $0xc] sm:$0xf]
        %v453 = vld [vmem:[%s5] sm:$0x1]
        %v455 = vperm.slane %v453, 0
        %v461 = vunpack.c.l.b16 %v449
        %v462 = vunpack.c.l.b16 %v450
        %v463 = vunpack.c.l.b16 %v451
        %v464 = vunpack.c.l.b16 %v452
        %v465 = vpack.c.b16 %v462, %v461
        %v466 = vpack.c.b16 %v464, %v463
        %v470 = vsel %vm304, %v448, 0
        %472 = vmatpush.bf16.msra.mxu0 0
        %473 = vmatpush.bf16.msra.mxu0 0
        %474 = vmatpush.bf16.msra.mxu0 0
        %475 = vmatpush.bf16.msra.mxu0 0
        %476 = vmatpush.bf16.msra.mxu0 0
        %477 = vmatpush.bf16.msra.mxu0 0
        %478 = vmatpush.bf16.msra.mxu0 %v466
        %479 = vmatpush.bf16.msra.mxu0 %v465
        %480 = vmatmul.bf16.gmra.mxu0 %v470
        %v481 = vpop.f32.mrf.mxu0
        %v482 = vadd.f32 %v455, %v481
        %v483 = vpop.f32.mrf.mxu0
        %484 = vdwg.mxu0
        %485 = vst.msk [vmem:[%s273] sm:$0xff] %vm304, %v482
        %s486 = sand.u32 %s164, 1
        %s487 = scalar_lea.sflag [#allocation3], %s486
        %s488 = sand.u32 %s164, 1
        %s489 = smul.addr %s488, 8
        %s490 = scalar_lea.vmem [#allocation2], %s489
        %s491 = sand.u32 %s190, 1
        %s492 = scalar_lea.sflag [#allocation5], %s491
        %s493 = sand.u32 %s190, 1
        %s494 = smul.addr %s493, 8
        %s495 = scalar_lea.vmem [#allocation4], %s494
        // Predicated region
        $region45: #{self_attention.1} parent=43 // pred_check
          %p496 = pneg %p174
        $region46: #{self_attention.1} parent=43 // pred_check_branch
          %498 = sbr.rel (%p496) target = $region48
        $region47: #{self_attention.1} parent=43 // pred_region
          %500 = vsyncadd %s487, 0
          %s501 = smul.addr %s25, 8
          %s502 = scalar_lea.hbm %s6, %s501
          %s504 = sshll.u32 %s490, 4
          %s505 = int_to_ptr.vmem [resolvable:$true] %s504
          %s506 = sshll.u32 %s502, 4
          %s507 = int_to_ptr.hbm [resolvable:$true] %s506
          %509 = dma.vmem_to_hbm [thread:$0]  %s505, 128, %s507, %s487
        $region48: #{self_attention.1} parent=43 // pred_fallthru
          _
        // Predicated region
        $region49: #{self_attention.1} parent=43 // pred_check
          %p510 = pneg %p200
        $region50: #{self_attention.1} parent=43 // pred_check_branch
          %512 = sbr.rel (%p510) target = $region52
        $region51: #{self_attention.1} parent=43 // pred_region
          %514 = vsyncadd %s492, 0
          %s515 = smul.addr %s25, 8
          %s516 = scalar_lea.hbm %s7, %s515
          %s518 = sshll.u32 %s495, 4
          %s519 = int_to_ptr.vmem [resolvable:$true] %s518
          %s520 = sshll.u32 %s516, 4
          %s521 = int_to_ptr.hbm [resolvable:$true] %s520
          %523 = dma.vmem_to_hbm [thread:$0]  %s519, 128, %s521, %s492
        $region52: #{self_attention.1} parent=43 // pred_fallthru
          _
      $region44: #{self_attention.1} parent=5 // pred_fallthru
        _
      %p524 = scmp.le.s32.totalorder 2, %s20
      // Predicated region
      $region53: #{self_attention.1} parent=5 // pred_check
        %p525 = pneg %p524
      $region54: #{self_attention.1} parent=5 // pred_check_branch
        %527 = sbr.rel (%p525) target = $region56
      $region55: #{self_attention.1} parent=5 // pred_region
        %s528 = ssub.s32 %s20, 2
        // Predicated region
        $region57: #{self_attention.1} parent=55 // pred_check
          %p529 = pneg %p180
        $region58: #{self_attention.1} parent=55 // pred_check_branch
          %531 = sbr.rel (%p529) target = $region60
        $region59: #{self_attention.1} parent=55 // pred_region
          %s532 = sand.u32 %s165, 1
          %s533 = scalar_lea.sflag [#allocation3], %s532
          %s534 = sand.u32 %s165, 1
          %s535 = smul.addr %s534, 8
          %s536 = scalar_lea.vmem [#allocation2], %s535
          %538 = dma.done %s533, 128
        $region60: #{self_attention.1} parent=55 // pred_fallthru
          _
        // Predicated region
        $region61: #{self_attention.1} parent=55 // pred_check
          %p539 = pneg %p206
        $region62: #{self_attention.1} parent=55 // pred_check_branch
          %541 = sbr.rel (%p539) target = $region64
        $region63: #{self_attention.1} parent=55 // pred_region
          %s542 = sand.u32 %s191, 1
          %s543 = scalar_lea.sflag [#allocation5], %s542
          %s544 = sand.u32 %s191, 1
          %s545 = smul.addr %s544, 8
          %s546 = scalar_lea.vmem [#allocation4], %s545
          %548 = dma.done %s543, 128
        $region64: #{self_attention.1} parent=55 // pred_fallthru
          _
      $region56: #{self_attention.1} parent=5 // pred_fallthru
        _
    $region6: #{self_attention.1} parent=1 // loop_footer
      %s24 = sadd.s32 1, %s20
    $region7: #{self_attention.1} parent=1 // loop_footer_branch
      %19 = sbr.rel target = $region3
    $region8: #{self_attention.1} parent=1 // loop_exit
      _
    %549 = vsyncpa [#allocation3], 1
    %s550 = scalar_lea.sflag [#allocation3], 1
    %551 = vsyncpa %s550, 1
    %552 = vsyncpa [#allocation5], 1
    %s553 = scalar_lea.sflag [#allocation5], 1
    %554 = vsyncpa %s553, 1

</llo_original>
